<compile_context>
chip_gen: v7x
topology: tpu7x:2x2x1
jax: 0.10.0
libtpu: 0.0.40
codegen_flags: <defaults>
</compile_context>

<pallas_src>
import numpy as np
import jax
import jax.numpy as jnp
from jax.experimental import pallas as pl
from jax.experimental.pallas import tpu as pltpu

IMAGENET_MEAN = np.array([0.485, 0.456, 0.406], dtype=np.float64)
IMAGENET_STD = np.array([0.229, 0.224, 0.225], dtype=np.float64)
GRAY_W = np.array([0.299, 0.587, 0.114], dtype=np.float64)  # sums to 1.0


# ------------------------- host-side weight building -------------------------

def _rrc_params(rng, H, W, scale=(0.2, 1.0), ratio=(3.0 / 4.0, 4.0 / 3.0)):
    """torchvision RandomResizedCrop.get_params (top, left, h, w)."""
    area = H * W
    log_ratio = (np.log(ratio[0]), np.log(ratio[1]))
    for _ in range(10):
        target_area = area * rng.uniform(scale[0], scale[1])
        aspect = np.exp(rng.uniform(log_ratio[0], log_ratio[1]))
        w = int(round(np.sqrt(target_area * aspect)))
        h = int(round(np.sqrt(target_area / aspect)))
        if 0 < w <= W and 0 < h <= H:
            top = int(rng.integers(0, H - h + 1))
            left = int(rng.integers(0, W - w + 1))
            return top, left, h, w
    in_ratio = W / H
    if in_ratio < ratio[0]:
        w = W
        h = int(round(w / ratio[0]))
    elif in_ratio > ratio[1]:
        h = H
        w = int(round(h * ratio[1]))
    else:
        w, h = W, H
    return (H - h) // 2, (W - w) // 2, h, w


def _resize_crop_matrix(in_size, crop_start, crop_size, out_size):
    """(out_size, in_size): crop [crop_start, crop_start+crop_size) then bilinear
    resize to out_size with PIL-style antialiasing (triangle filter widened by the
    downscale factor). Reduces to plain bilinear when upscaling."""
    scale = crop_size / out_size
    fscale = max(scale, 1.0)
    support = 1.0 * fscale
    w = np.zeros((out_size, in_size), dtype=np.float64)
    for i in range(out_size):
        center = (i + 0.5) * scale
        lo = max(int(center - support + 0.5), 0)
        hi = min(int(center + support + 0.5), crop_size)
        js = np.arange(lo, hi)
        vals = np.clip(1.0 - np.abs((js + 0.5 - center) / fscale), 0.0, None)
        s = vals.sum()
        if s <= 0.0 or js.size == 0:
            js = np.array([min(max(int(center), 0), crop_size - 1)])
            vals = np.array([1.0])
            s = 1.0
        w[i, crop_start + js] = vals / s
    return w


def _gaussian_matrix(size, sigma):
    """(size, size) separable Gaussian blur with replicate padding at the borders."""
    radius = max(1, int(np.ceil(3.0 * sigma)))
    offs = np.arange(-radius, radius + 1)
    g = np.exp(-0.5 * (offs / sigma) ** 2)
    g /= g.sum()
    m = np.zeros((size, size), dtype=np.float64)
    for i in range(size):
        idx = np.clip(i + offs, 0, size - 1)
        np.add.at(m[i], idx, g)
    return m


def _sample_view(rng, H_in, W_in, height):
    """Sample one augmented view; return its fused weights."""
    top, left, ch, cw = _rrc_params(rng, H_in, W_in)
    # ColorJitter(0.4, 0.4, 0.4, 0.1) with p=0.8 (fixed order, hue skipped).
    if rng.random() < 0.8:
        b = rng.uniform(0.6, 1.4)
        cf = rng.uniform(0.6, 1.4)
        sf = rng.uniform(0.6, 1.4)
        _hue = rng.uniform(-0.1, 0.1)  # sampled but unused (see TODO at top)
    else:
        b = cf = sf = 1.0
    gray = rng.random() < 0.2
    sigma = rng.uniform(0.1, 2.0) if rng.random() < 0.5 else 0.0
    vflip = rng.random() < 0.5
    hflip = rng.random() < 0.5

    wh = _resize_crop_matrix(H_in, top, ch, height)   # (height, H_in) rows
    ww = _resize_crop_matrix(W_in, left, cw, height)  # (height, W_in) cols
    if sigma > 0.0:
        g = _gaussian_matrix(height, sigma)           # separable blur, folded in
        wh = g @ wh
        ww = g @ ww
    if vflip:
        wh = wh[::-1]
    if hflip:
        ww = ww[::-1]
    wh = wh * (b / 255.0)                             # fold brightness + ToTensor 1/255
    wwt = np.ascontiguousarray(ww.T)                  # pre-transposed: (W_in, height)

    g3 = np.ones((3, 1)) @ GRAY_W[None, :]            # grayscale channel mix
    mix = g3 if gray else (sf * np.eye(3) + (1.0 - sf) * g3)   # saturation / grayscale
    cmat = cf * mix / IMAGENET_STD[:, None]           # contrast gain + mix + 1/std
    cm = (1.0 - cf) / IMAGENET_STD                    # coefficient of the gray mean
    cb = -IMAGENET_MEAN / IMAGENET_STD                # Normalize bias
    return (wh.astype(np.float32), wwt.astype(np.float32),
            cmat.astype(np.float32), cm.astype(np.float32), cb.astype(np.float32))


def build_view_weights(seed, H_in, W_in, height):
    """Fused augmentation weights for the two views (q, k)."""
    rng = np.random.default_rng(seed)
    views = [_sample_view(rng, H_in, W_in, height) for _ in range(2)]
    wh, wwt, cmat, cm, cb = (np.stack(z) for z in zip(*views))
    # Concatenate the per-view column matrices along N so the first (dominant) MXU
    # matmul computes both views at once with N = 2*height (fills v6e/v7x's 256-wide MXU).
    wwt_cat = np.concatenate([wwt[0], wwt[1]], axis=-1)   # (W_in, 2*height)
    return dict(wh=wh, wwt_cat=wwt_cat, cmat=cmat, cm=cm, cb=cb)


# ------------------------------- Pallas kernel --------------------------------

def _make_kernel(H_in, W_in, height):
    def kernel(cmat_ref, cm_ref, cb_ref, wh_ref, wwt_ref, x_ref, out_ref):
        # uint8 -> bf16 in-kernel (exact for 0..255): smallest HBM read, bf16-native MXU.
        x = x_ref[...].astype(jnp.bfloat16)                       # (3*H_in, W_in)
        # Column crop/resize/blur/hflip for all 3 channels AND both views in ONE
        # stacked bf16 MXU matmul with f32 accumulation (N = 2*height).
        z = jnp.dot(x, wwt_ref[...], preferred_element_type=jnp.float32)  # (3*H_in, 2*height) f32
        for v in range(2):
            wh = wh_ref[v]                                        # (height, H_in) bf16
            ys = []
            for c in range(3):
                zc = z[c * H_in:(c + 1) * H_in, v * height:(v + 1) * height]
                # Row crop/resize/blur/vflip with brightness/255 folded in (bf16 MXU, f32 acc).
                ys.append(jnp.dot(wh, zc.astype(jnp.bfloat16),
                                  preferred_element_type=jnp.float32))
            # Contrast reference level: spatial mean of the grayscale image.
            m = 0.299 * jnp.mean(ys[0]) + 0.587 * jnp.mean(ys[1]) + 0.114 * jnp.mean(ys[2])
            # Fused contrast + saturation/grayscale channel mix + Normalize:
            #   out[v,c] = sum_d A[c,d]*y[d] + cm[c]*m + cb[c]
            for c in range(3):
                out_ref[v, c, :, :] = (cmat_ref[v, 3 * c + 0] * ys[0]
                                       + cmat_ref[v, 3 * c + 1] * ys[1]
                                       + cmat_ref[v, 3 * c + 2] * ys[2]
                                       + (cm_ref[v, c] * m + cb_ref[v, c]))
    return kernel


def _pallas_forward(inp_u8, w, height):
    C, H_in, W_in = inp_u8.shape
    kernel = _make_kernel(H_in, W_in, height)
    out = pl.pallas_call(
        kernel,
        # No grid: both views are computed in a single invocation (single image DMA,
        # single uint8->bf16 cast, wide-N first matmul).
        in_specs=[
            pl.BlockSpec(memory_space=pltpu.MemorySpace.SMEM),   # cmat (2, 9)
            pl.BlockSpec(memory_space=pltpu.MemorySpace.SMEM),   # cm   (2, 3)
            pl.BlockSpec(memory_space=pltpu.MemorySpace.SMEM),   # cb   (2, 3)
            pl.BlockSpec(memory_space=pltpu.MemorySpace.VMEM),   # Wh   (2, height, H_in) bf16
            pl.BlockSpec(memory_space=pltpu.MemorySpace.VMEM),   # Wwt  (W_in, 2*height) bf16
            pl.BlockSpec(memory_space=pltpu.MemorySpace.VMEM),   # image (3*H_in, W_in) uint8
        ],
        out_specs=pl.BlockSpec(memory_space=pltpu.MemorySpace.VMEM),
        out_shape=jax.ShapeDtypeStruct((2, C, height, height), jnp.float32),
    )(
        jnp.asarray(w["cmat"].reshape(2, 9)),
        jnp.asarray(w["cm"]),
        jnp.asarray(w["cb"]),
        jnp.asarray(w["wh"]).astype(jnp.bfloat16),
        jnp.asarray(w["wwt_cat"]).astype(jnp.bfloat16),
        inp_u8.reshape(3 * H_in, W_in),   # pre-reshaped in HBM: no in-kernel reshape
    )
    return out


def moco2_train_covidxct_transforms(inp, height: int = 128, seed: int = 0):
    """inp: (3, H, W) uint8 CHW image. Returns (q, k): two independently augmented
    (3, height, height) float32 views (normalized with ImageNet mean/std)."""
    C, H_in, W_in = inp.shape
    assert C == 3, "expected a CHW RGB image"
    if inp.dtype != jnp.uint8:
        inp = jnp.clip(jnp.round(inp), 0, 255).astype(jnp.uint8)
    w = build_view_weights(seed, H_in, W_in, height)
    out = _pallas_forward(inp, w, height)
    return out[0], out[1]


# -------------------------------- reference -----------------------------------

def _reference(inp_u8, w, height):
    """Pure-JAX reference of the same fused math, emulating the kernel's bf16 MXU
    inputs with f32 accumulation."""
    C, H_in, W_in = inp_u8.shape
    x = jnp.asarray(inp_u8).reshape(3 * H_in, W_in).astype(jnp.bfloat16)
    wh = jnp.asarray(w["wh"]).astype(jnp.bfloat16)           # (2, height, H_in)
    wwt = jnp.asarray(w["wwt_cat"]).astype(jnp.bfloat16)     # (W_in, 2*height)
    z = jnp.dot(x, wwt, preferred_element_type=jnp.float32)  # (3*H_in, 2*height)
    outs = []
    for v in range(2):
        ys = []
        for c in range(3):
            zc = z[c * H_in:(c + 1) * H_in, v * height:(v + 1) * height].astype(jnp.bfloat16)
            ys.append(jnp.dot(wh[v], zc, preferred_element_type=jnp.float32))
        m = 0.299 * jnp.mean(ys[0]) + 0.587 * jnp.mean(ys[1]) + 0.114 * jnp.mean(ys[2])
        A = w["cmat"][v]
        cm = w["cm"][v]
        cb = w["cb"][v]
        out = jnp.stack([A[c, 0] * ys[0] + A[c, 1] * ys[1] + A[c, 2] * ys[2]
                         + cm[c] * m + cb[c] for c in range(3)])
        outs.append(out)
    return outs[0], outs[1]


if __name__ == "__main__":
    key = jax.random.PRNGKey(0)
    H_in, W_in, height, seed = 32, 40, 16, 0
    inp = jax.random.randint(key, (3, H_in, W_in), 0, 256, dtype=jnp.int32).astype(jnp.uint8)

    q, k = moco2_train_covidxct_transforms(inp, height=height, seed=seed)
    q, k = jax.block_until_ready(q), jax.block_until_ready(k)

    w = build_view_weights(seed, H_in, W_in, height)  # same seed -> same weights
    q_ref, k_ref = _reference(inp, w, height)

    assert q.shape == (3, height, height) and k.shape == (3, height, height)
    # bf16 MXU inputs / f32 accumulation in both kernel and reference; only the
    # accumulation order differs, so a loose-ish tolerance is ample.
    np.testing.assert_allclose(np.asarray(q), np.asarray(q_ref), rtol=1e-2, atol=1e-2)
    np.testing.assert_allclose(np.asarray(k), np.asarray(k_ref), rtol=1e-2, atol=1e-2)

    print("KERNEL_OK")
</pallas_src>

<mosaic_0001>
module attributes {stable_mosaic.version = 11 : i64} {
  func.func @kernel(%arg0: memref<2x9xf32, #tpu.memory_space<smem>>, %arg1: memref<2x3xf32, #tpu.memory_space<smem>>, %arg2: memref<2x3xf32, #tpu.memory_space<smem>>, %arg3: memref<2x16x32xbf16, #tpu.memory_space<vmem>>, %arg4: memref<40x32xbf16, #tpu.memory_space<vmem>>, %arg5: memref<96x40xi8, #tpu.memory_space<vmem>>, %arg6: memref<2x3x16x16xf32, #tpu.memory_space<vmem>>) attributes {dimension_semantics = [], scalar_prefetch = 0 : i64, scratch_operands = 0 : i64, tpu.core_type = #tpu.core_type<tc>} {
    %c0 = arith.constant 0 : index
    %c0_0 = arith.constant 0 : index
    %0 = vector.load %arg5[%c0, %c0_0] : memref<96x40xi8, #tpu.memory_space<vmem>>, vector<96x40xi8>
    %1 = arith.uitofp %0 : vector<96x40xi8> to vector<96x40xbf16>
    %c0_1 = arith.constant 0 : index
    %c0_2 = arith.constant 0 : index
    %2 = vector.load %arg4[%c0_1, %c0_2] : memref<40x32xbf16, #tpu.memory_space<vmem>>, vector<40x32xbf16>
    %cst = arith.constant dense<0.000000e+00> : vector<96x32xf32>
    %3 = tpu.matmul %1, %2, %cst {dimension_numbers = #tpu.dot_dimension_numbers<[1], [0], [0], [1], [0, 0, 1, 1], [], []>} : vector<96x40xbf16>, vector<40x32xbf16>, vector<96x32xf32> -> vector<96x32xf32>
    %c0_3 = arith.constant 0 : index
    %c0_4 = arith.constant 0 : index
    %c0_5 = arith.constant 0 : index
    %4 = vector.load %arg3[%c0_3, %c0_4, %c0_5] : memref<2x16x32xbf16, #tpu.memory_space<vmem>>, vector<1x16x32xbf16>
    %5 = vector.shape_cast %4 : vector<1x16x32xbf16> to vector<16x32xbf16>
    %6 = vector.extract_strided_slice %3 {offsets = [0, 0], sizes = [32, 16], strides = [1, 1]} : vector<96x32xf32> to vector<32x16xf32>
    %7 = arith.truncf %6 : vector<32x16xf32> to vector<32x16xbf16>
    %cst_6 = arith.constant dense<0.000000e+00> : vector<16x16xf32>
    %8 = tpu.matmul %5, %7, %cst_6 {dimension_numbers = #tpu.dot_dimension_numbers<[1], [0], [0], [1], [0, 0, 1, 1], [], []>} : vector<16x32xbf16>, vector<32x16xbf16>, vector<16x16xf32> -> vector<16x16xf32>
    %9 = vector.extract_strided_slice %3 {offsets = [32, 0], sizes = [32, 16], strides = [1, 1]} : vector<96x32xf32> to vector<32x16xf32>
    %10 = arith.truncf %9 : vector<32x16xf32> to vector<32x16xbf16>
    %cst_7 = arith.constant dense<0.000000e+00> : vector<16x16xf32>
    %11 = tpu.matmul %5, %10, %cst_7 {dimension_numbers = #tpu.dot_dimension_numbers<[1], [0], [0], [1], [0, 0, 1, 1], [], []>} : vector<16x32xbf16>, vector<32x16xbf16>, vector<16x16xf32> -> vector<16x16xf32>
    %12 = vector.extract_strided_slice %3 {offsets = [64, 0], sizes = [32, 16], strides = [1, 1]} : vector<96x32xf32> to vector<32x16xf32>
    %13 = arith.truncf %12 : vector<32x16xf32> to vector<32x16xbf16>
    %cst_8 = arith.constant dense<0.000000e+00> : vector<16x16xf32>
    %14 = tpu.matmul %5, %13, %cst_8 {dimension_numbers = #tpu.dot_dimension_numbers<[1], [0], [0], [1], [0, 0, 1, 1], [], []>} : vector<16x32xbf16>, vector<32x16xbf16>, vector<16x16xf32> -> vector<16x16xf32>
    %15 = vector.shape_cast %8 : vector<16x16xf32> to vector<1x16x16xf32>
    %cst_9 = arith.constant dense<0.000000e+00> : vector<1xf32>
    %16 = vector.multi_reduction <add>, %15, %cst_9 [1, 2] : vector<1x16x16xf32> to vector<1xf32>
    %17 = vector.shape_cast %16 : vector<1xf32> to vector<1x1x1xf32>
    %18 = vector.extract %17[0, 0, 0] : f32 from vector<1x1x1xf32>
    %cst_10 = arith.constant 2.560000e+02 : f32
    %19 = arith.divf %18, %cst_10 : f32
    %cst_11 = arith.constant 2.990000e-01 : f32
    %20 = arith.mulf %cst_11, %19 : f32
    %21 = vector.shape_cast %11 : vector<16x16xf32> to vector<1x16x16xf32>
    %cst_12 = arith.constant dense<0.000000e+00> : vector<1xf32>
    %22 = vector.multi_reduction <add>, %21, %cst_12 [1, 2] : vector<1x16x16xf32> to vector<1xf32>
    %23 = vector.shape_cast %22 : vector<1xf32> to vector<1x1x1xf32>
    %24 = vector.extract %23[0, 0, 0] : f32 from vector<1x1x1xf32>
    %cst_13 = arith.constant 2.560000e+02 : f32
    %25 = arith.divf %24, %cst_13 : f32
    %cst_14 = arith.constant 5.870000e-01 : f32
    %26 = arith.mulf %cst_14, %25 : f32
    %27 = arith.addf %20, %26 : f32
    %28 = vector.shape_cast %14 : vector<16x16xf32> to vector<1x16x16xf32>
    %cst_15 = arith.constant dense<0.000000e+00> : vector<1xf32>
    %29 = vector.multi_reduction <add>, %28, %cst_15 [1, 2] : vector<1x16x16xf32> to vector<1xf32>
    %30 = vector.shape_cast %29 : vector<1xf32> to vector<1x1x1xf32>
    %31 = vector.extract %30[0, 0, 0] : f32 from vector<1x1x1xf32>
    %cst_16 = arith.constant 2.560000e+02 : f32
    %32 = arith.divf %31, %cst_16 : f32
    %cst_17 = arith.constant 1.140000e-01 : f32
    %33 = arith.mulf %cst_17, %32 : f32
    %34 = arith.addf %27, %33 : f32
    %c0_18 = arith.constant 0 : index
    %c0_19 = arith.constant 0 : index
    %35 = memref.load %arg0[%c0_18, %c0_19] : memref<2x9xf32, #tpu.memory_space<smem>>
    %36 = vector.broadcast %35 : f32 to vector<16x16xf32>
    %37 = arith.mulf %36, %8 : vector<16x16xf32>
    %c0_20 = arith.constant 0 : index
    %c1 = arith.constant 1 : index
    %38 = memref.load %arg0[%c0_20, %c1] : memref<2x9xf32, #tpu.memory_space<smem>>
    %39 = vector.broadcast %38 : f32 to vector<16x16xf32>
    %40 = arith.mulf %39, %11 : vector<16x16xf32>
    %41 = arith.addf %37, %40 : vector<16x16xf32>
    %c0_21 = arith.constant 0 : index
    %c2 = arith.constant 2 : index
    %42 = memref.load %arg0[%c0_21, %c2] : memref<2x9xf32, #tpu.memory_space<smem>>
    %43 = vector.broadcast %42 : f32 to vector<16x16xf32>
    %44 = arith.mulf %43, %14 : vector<16x16xf32>
    %45 = arith.addf %41, %44 : vector<16x16xf32>
    %c0_22 = arith.constant 0 : index
    %c0_23 = arith.constant 0 : index
    %46 = memref.load %arg1[%c0_22, %c0_23] : memref<2x3xf32, #tpu.memory_space<smem>>
    %47 = arith.mulf %46, %34 : f32
    %c0_24 = arith.constant 0 : index
    %c0_25 = arith.constant 0 : index
    %48 = memref.load %arg2[%c0_24, %c0_25] : memref<2x3xf32, #tpu.memory_space<smem>>
    %49 = arith.addf %47, %48 : f32
    %50 = vector.broadcast %49 : f32 to vector<16x16xf32>
    %51 = arith.addf %45, %50 : vector<16x16xf32>
    %c0_26 = arith.constant 0 : index
    %c0_27 = arith.constant 0 : index
    %c0_28 = arith.constant 0 : index
    %c0_29 = arith.constant 0 : index
    %52 = vector.load %arg6[%c0_26, %c0_27, %c0_28, %c0_29] : memref<2x3x16x16xf32, #tpu.memory_space<vmem>>, vector<1x1x16x16xf32>
    %53 = vector.shape_cast %52 : vector<1x1x16x16xf32> to vector<16x16xf32>
    %54 = vector.shape_cast %51 : vector<16x16xf32> to vector<1x1x16x16xf32>
    tpu.vector_store %arg6[%c0_26, %c0_27, %c0_28, %c0_29], %54 {strides = array<i32>} : memref<2x3x16x16xf32, #tpu.memory_space<vmem>>, vector<1x1x16x16xf32>,
    %c0_30 = arith.constant 0 : index
    %c3 = arith.constant 3 : index
    %55 = memref.load %arg0[%c0_30, %c3] : memref<2x9xf32, #tpu.memory_space<smem>>
    %56 = vector.broadcast %55 : f32 to vector<16x16xf32>
    %57 = arith.mulf %56, %8 : vector<16x16xf32>
    %c0_31 = arith.constant 0 : index
    %c4 = arith.constant 4 : index
    %58 = memref.load %arg0[%c0_31, %c4] : memref<2x9xf32, #tpu.memory_space<smem>>
    %59 = vector.broadcast %58 : f32 to vector<16x16xf32>
    %60 = arith.mulf %59, %11 : vector<16x16xf32>
    %61 = arith.addf %57, %60 : vector<16x16xf32>
    %c0_32 = arith.constant 0 : index
    %c5 = arith.constant 5 : index
    %62 = memref.load %arg0[%c0_32, %c5] : memref<2x9xf32, #tpu.memory_space<smem>>
    %63 = vector.broadcast %62 : f32 to vector<16x16xf32>
    %64 = arith.mulf %63, %14 : vector<16x16xf32>
    %65 = arith.addf %61, %64 : vector<16x16xf32>
    %c0_33 = arith.constant 0 : index
    %c1_34 = arith.constant 1 : index
    %66 = memref.load %arg1[%c0_33, %c1_34] : memref<2x3xf32, #tpu.memory_space<smem>>
    %67 = arith.mulf %66, %34 : f32
    %c0_35 = arith.constant 0 : index
    %c1_36 = arith.constant 1 : index
    %68 = memref.load %arg2[%c0_35, %c1_36] : memref<2x3xf32, #tpu.memory_space<smem>>
    %69 = arith.addf %67, %68 : f32
    %70 = vector.broadcast %69 : f32 to vector<16x16xf32>
    %71 = arith.addf %65, %70 : vector<16x16xf32>
    %c0_37 = arith.constant 0 : index
    %c1_38 = arith.constant 1 : index
    %c0_39 = arith.constant 0 : index
    %c0_40 = arith.constant 0 : index
    %72 = vector.load %arg6[%c0_37, %c1_38, %c0_39, %c0_40] : memref<2x3x16x16xf32, #tpu.memory_space<vmem>>, vector<1x1x16x16xf32>
    %73 = vector.shape_cast %72 : vector<1x1x16x16xf32> to vector<16x16xf32>
    %74 = vector.shape_cast %71 : vector<16x16xf32> to vector<1x1x16x16xf32>
    tpu.vector_store %arg6[%c0_37, %c1_38, %c0_39, %c0_40], %74 {strides = array<i32>} : memref<2x3x16x16xf32, #tpu.memory_space<vmem>>, vector<1x1x16x16xf32>,
    %c0_41 = arith.constant 0 : index
    %c6 = arith.constant 6 : index
    %75 = memref.load %arg0[%c0_41, %c6] : memref<2x9xf32, #tpu.memory_space<smem>>
    %76 = vector.broadcast %75 : f32 to vector<16x16xf32>
    %77 = arith.mulf %76, %8 : vector<16x16xf32>
    %c0_42 = arith.constant 0 : index
    %c7 = arith.constant 7 : index
    %78 = memref.load %arg0[%c0_42, %c7] : memref<2x9xf32, #tpu.memory_space<smem>>
    %79 = vector.broadcast %78 : f32 to vector<16x16xf32>
    %80 = arith.mulf %79, %11 : vector<16x16xf32>
    %81 = arith.addf %77, %80 : vector<16x16xf32>
    %c0_43 = arith.constant 0 : index
    %c8 = arith.constant 8 : index
    %82 = memref.load %arg0[%c0_43, %c8] : memref<2x9xf32, #tpu.memory_space<smem>>
    %83 = vector.broadcast %82 : f32 to vector<16x16xf32>
    %84 = arith.mulf %83, %14 : vector<16x16xf32>
    %85 = arith.addf %81, %84 : vector<16x16xf32>
    %c0_44 = arith.constant 0 : index
    %c2_45 = arith.constant 2 : index
    %86 = memref.load %arg1[%c0_44, %c2_45] : memref<2x3xf32, #tpu.memory_space<smem>>
    %87 = arith.mulf %86, %34 : f32
    %c0_46 = arith.constant 0 : index
    %c2_47 = arith.constant 2 : index
    %88 = memref.load %arg2[%c0_46, %c2_47] : memref<2x3xf32, #tpu.memory_space<smem>>
    %89 = arith.addf %87, %88 : f32
    %90 = vector.broadcast %89 : f32 to vector<16x16xf32>
    %91 = arith.addf %85, %90 : vector<16x16xf32>
    %c0_48 = arith.constant 0 : index
    %c2_49 = arith.constant 2 : index
    %c0_50 = arith.constant 0 : index
    %c0_51 = arith.constant 0 : index
    %92 = vector.load %arg6[%c0_48, %c2_49, %c0_50, %c0_51] : memref<2x3x16x16xf32, #tpu.memory_space<vmem>>, vector<1x1x16x16xf32>
    %93 = vector.shape_cast %92 : vector<1x1x16x16xf32> to vector<16x16xf32>
    %94 = vector.shape_cast %91 : vector<16x16xf32> to vector<1x1x16x16xf32>
    tpu.vector_store %arg6[%c0_48, %c2_49, %c0_50, %c0_51], %94 {strides = array<i32>} : memref<2x3x16x16xf32, #tpu.memory_space<vmem>>, vector<1x1x16x16xf32>,
    %c1_52 = arith.constant 1 : index
    %c0_53 = arith.constant 0 : index
    %c0_54 = arith.constant 0 : index
    %95 = vector.load %arg3[%c1_52, %c0_53, %c0_54] : memref<2x16x32xbf16, #tpu.memory_space<vmem>>, vector<1x16x32xbf16>
    %96 = vector.shape_cast %95 : vector<1x16x32xbf16> to vector<16x32xbf16>
    %97 = vector.extract_strided_slice %3 {offsets = [0, 16], sizes = [32, 16], strides = [1, 1]} : vector<96x32xf32> to vector<32x16xf32>
    %98 = arith.truncf %97 : vector<32x16xf32> to vector<32x16xbf16>
    %cst_55 = arith.constant dense<0.000000e+00> : vector<16x16xf32>
    %99 = tpu.matmul %96, %98, %cst_55 {dimension_numbers = #tpu.dot_dimension_numbers<[1], [0], [0], [1], [0, 0, 1, 1], [], []>} : vector<16x32xbf16>, vector<32x16xbf16>, vector<16x16xf32> -> vector<16x16xf32>
    %100 = vector.extract_strided_slice %3 {offsets = [32, 16], sizes = [32, 16], strides = [1, 1]} : vector<96x32xf32> to vector<32x16xf32>
    %101 = arith.truncf %100 : vector<32x16xf32> to vector<32x16xbf16>
    %cst_56 = arith.constant dense<0.000000e+00> : vector<16x16xf32>
    %102 = tpu.matmul %96, %101, %cst_56 {dimension_numbers = #tpu.dot_dimension_numbers<[1], [0], [0], [1], [0, 0, 1, 1], [], []>} : vector<16x32xbf16>, vector<32x16xbf16>, vector<16x16xf32> -> vector<16x16xf32>
    %103 = vector.extract_strided_slice %3 {offsets = [64, 16], sizes = [32, 16], strides = [1, 1]} : vector<96x32xf32> to vector<32x16xf32>
    %104 = arith.truncf %103 : vector<32x16xf32> to vector<32x16xbf16>
    %cst_57 = arith.constant dense<0.000000e+00> : vector<16x16xf32>
    %105 = tpu.matmul %96, %104, %cst_57 {dimension_numbers = #tpu.dot_dimension_numbers<[1], [0], [0], [1], [0, 0, 1, 1], [], []>} : vector<16x32xbf16>, vector<32x16xbf16>, vector<16x16xf32> -> vector<16x16xf32>
    %106 = vector.shape_cast %99 : vector<16x16xf32> to vector<1x16x16xf32>
    %cst_58 = arith.constant dense<0.000000e+00> : vector<1xf32>
    %107 = vector.multi_reduction <add>, %106, %cst_58 [1, 2] : vector<1x16x16xf32> to vector<1xf32>
    %108 = vector.shape_cast %107 : vector<1xf32> to vector<1x1x1xf32>
    %109 = vector.extract %108[0, 0, 0] : f32 from vector<1x1x1xf32>
    %cst_59 = arith.constant 2.560000e+02 : f32
    %110 = arith.divf %109, %cst_59 : f32
    %cst_60 = arith.constant 2.990000e-01 : f32
    %111 = arith.mulf %cst_60, %110 : f32
    %112 = vector.shape_cast %102 : vector<16x16xf32> to vector<1x16x16xf32>
    %cst_61 = arith.constant dense<0.000000e+00> : vector<1xf32>
    %113 = vector.multi_reduction <add>, %112, %cst_61 [1, 2] : vector<1x16x16xf32> to vector<1xf32>
    %114 = vector.shape_cast %113 : vector<1xf32> to vector<1x1x1xf32>
    %115 = vector.extract %114[0, 0, 0] : f32 from vector<1x1x1xf32>
    %cst_62 = arith.constant 2.560000e+02 : f32
    %116 = arith.divf %115, %cst_62 : f32
    %cst_63 = arith.constant 5.870000e-01 : f32
    %117 = arith.mulf %cst_63, %116 : f32
    %118 = arith.addf %111, %117 : f32
    %119 = vector.shape_cast %105 : vector<16x16xf32> to vector<1x16x16xf32>
    %cst_64 = arith.constant dense<0.000000e+00> : vector<1xf32>
    %120 = vector.multi_reduction <add>, %119, %cst_64 [1, 2] : vector<1x16x16xf32> to vector<1xf32>
    %121 = vector.shape_cast %120 : vector<1xf32> to vector<1x1x1xf32>
    %122 = vector.extract %121[0, 0, 0] : f32 from vector<1x1x1xf32>
    %cst_65 = arith.constant 2.560000e+02 : f32
    %123 = arith.divf %122, %cst_65 : f32
    %cst_66 = arith.constant 1.140000e-01 : f32
    %124 = arith.mulf %cst_66, %123 : f32
    %125 = arith.addf %118, %124 : f32
    %c1_67 = arith.constant 1 : index
    %c0_68 = arith.constant 0 : index
    %126 = memref.load %arg0[%c1_67, %c0_68] : memref<2x9xf32, #tpu.memory_space<smem>>
    %127 = vector.broadcast %126 : f32 to vector<16x16xf32>
    %128 = arith.mulf %127, %99 : vector<16x16xf32>
    %c1_69 = arith.constant 1 : index
    %c1_70 = arith.constant 1 : index
    %129 = memref.load %arg0[%c1_69, %c1_70] : memref<2x9xf32, #tpu.memory_space<smem>>
    %130 = vector.broadcast %129 : f32 to vector<16x16xf32>
    %131 = arith.mulf %130, %102 : vector<16x16xf32>
    %132 = arith.addf %128, %131 : vector<16x16xf32>
    %c1_71 = arith.constant 1 : index
    %c2_72 = arith.constant 2 : index
    %133 = memref.load %arg0[%c1_71, %c2_72] : memref<2x9xf32, #tpu.memory_space<smem>>
    %134 = vector.broadcast %133 : f32 to vector<16x16xf32>
    %135 = arith.mulf %134, %105 : vector<16x16xf32>
    %136 = arith.addf %132, %135 : vector<16x16xf32>
    %c1_73 = arith.constant 1 : index
    %c0_74 = arith.constant 0 : index
    %137 = memref.load %arg1[%c1_73, %c0_74] : memref<2x3xf32, #tpu.memory_space<smem>>
    %138 = arith.mulf %137, %125 : f32
    %c1_75 = arith.constant 1 : index
    %c0_76 = arith.constant 0 : index
    %139 = memref.load %arg2[%c1_75, %c0_76] : memref<2x3xf32, #tpu.memory_space<smem>>
    %140 = arith.addf %138, %139 : f32
    %141 = vector.broadcast %140 : f32 to vector<16x16xf32>
    %142 = arith.addf %136, %141 : vector<16x16xf32>
    %c1_77 = arith.constant 1 : index
    %c0_78 = arith.constant 0 : index
    %c0_79 = arith.constant 0 : index
    %c0_80 = arith.constant 0 : index
    %143 = vector.load %arg6[%c1_77, %c0_78, %c0_79, %c0_80] : memref<2x3x16x16xf32, #tpu.memory_space<vmem>>, vector<1x1x16x16xf32>
    %144 = vector.shape_cast %143 : vector<1x1x16x16xf32> to vector<16x16xf32>
    %145 = vector.shape_cast %142 : vector<16x16xf32> to vector<1x1x16x16xf32>
    tpu.vector_store %arg6[%c1_77, %c0_78, %c0_79, %c0_80], %145 {strides = array<i32>} : memref<2x3x16x16xf32, #tpu.memory_space<vmem>>, vector<1x1x16x16xf32>,
    %c1_81 = arith.constant 1 : index
    %c3_82 = arith.constant 3 : index
    %146 = memref.load %arg0[%c1_81, %c3_82] : memref<2x9xf32, #tpu.memory_space<smem>>
    %147 = vector.broadcast %146 : f32 to vector<16x16xf32>
    %148 = arith.mulf %147, %99 : vector<16x16xf32>
    %c1_83 = arith.constant 1 : index
    %c4_84 = arith.constant 4 : index
    %149 = memref.load %arg0[%c1_83, %c4_84] : memref<2x9xf32, #tpu.memory_space<smem>>
    %150 = vector.broadcast %149 : f32 to vector<16x16xf32>
    %151 = arith.mulf %150, %102 : vector<16x16xf32>
    %152 = arith.addf %148, %151 : vector<16x16xf32>
    %c1_85 = arith.constant 1 : index
    %c5_86 = arith.constant 5 : index
    %153 = memref.load %arg0[%c1_85, %c5_86] : memref<2x9xf32, #tpu.memory_space<smem>>
    %154 = vector.broadcast %153 : f32 to vector<16x16xf32>
    %155 = arith.mulf %154, %105 : vector<16x16xf32>
    %156 = arith.addf %152, %155 : vector<16x16xf32>
    %c1_87 = arith.constant 1 : index
    %c1_88 = arith.constant 1 : index
    %157 = memref.load %arg1[%c1_87, %c1_88] : memref<2x3xf32, #tpu.memory_space<smem>>
    %158 = arith.mulf %157, %125 : f32
    %c1_89 = arith.constant 1 : index
    %c1_90 = arith.constant 1 : index
    %159 = memref.load %arg2[%c1_89, %c1_90] : memref<2x3xf32, #tpu.memory_space<smem>>
    %160 = arith.addf %158, %159 : f32
    %161 = vector.broadcast %160 : f32 to vector<16x16xf32>
    %162 = arith.addf %156, %161 : vector<16x16xf32>
    %c1_91 = arith.constant 1 : index
    %c1_92 = arith.constant 1 : index
    %c0_93 = arith.constant 0 : index
    %c0_94 = arith.constant 0 : index
    %163 = vector.load %arg6[%c1_91, %c1_92, %c0_93, %c0_94] : memref<2x3x16x16xf32, #tpu.memory_space<vmem>>, vector<1x1x16x16xf32>
    %164 = vector.shape_cast %163 : vector<1x1x16x16xf32> to vector<16x16xf32>
    %165 = vector.shape_cast %162 : vector<16x16xf32> to vector<1x1x16x16xf32>
    tpu.vector_store %arg6[%c1_91, %c1_92, %c0_93, %c0_94], %165 {strides = array<i32>} : memref<2x3x16x16xf32, #tpu.memory_space<vmem>>, vector<1x1x16x16xf32>,
    %c1_95 = arith.constant 1 : index
    %c6_96 = arith.constant 6 : index
    %166 = memref.load %arg0[%c1_95, %c6_96] : memref<2x9xf32, #tpu.memory_space<smem>>
    %167 = vector.broadcast %166 : f32 to vector<16x16xf32>
    %168 = arith.mulf %167, %99 : vector<16x16xf32>
    %c1_97 = arith.constant 1 : index
    %c7_98 = arith.constant 7 : index
    %169 = memref.load %arg0[%c1_97, %c7_98] : memref<2x9xf32, #tpu.memory_space<smem>>
    %170 = vector.broadcast %169 : f32 to vector<16x16xf32>
    %171 = arith.mulf %170, %102 : vector<16x16xf32>
    %172 = arith.addf %168, %171 : vector<16x16xf32>
    %c1_99 = arith.constant 1 : index
    %c8_100 = arith.constant 8 : index
    %173 = memref.load %arg0[%c1_99, %c8_100] : memref<2x9xf32, #tpu.memory_space<smem>>
    %174 = vector.broadcast %173 : f32 to vector<16x16xf32>
    %175 = arith.mulf %174, %105 : vector<16x16xf32>
    %176 = arith.addf %172, %175 : vector<16x16xf32>
    %c1_101 = arith.constant 1 : index
    %c2_102 = arith.constant 2 : index
    %177 = memref.load %arg1[%c1_101, %c2_102] : memref<2x3xf32, #tpu.memory_space<smem>>
    %178 = arith.mulf %177, %125 : f32
    %c1_103 = arith.constant 1 : index
    %c2_104 = arith.constant 2 : index
    %179 = memref.load %arg2[%c1_103, %c2_104] : memref<2x3xf32, #tpu.memory_space<smem>>
    %180 = arith.addf %178, %179 : f32
    %181 = vector.broadcast %180 : f32 to vector<16x16xf32>
    %182 = arith.addf %176, %181 : vector<16x16xf32>
    %c1_105 = arith.constant 1 : index
    %c2_106 = arith.constant 2 : index
    %c0_107 = arith.constant 0 : index
    %c0_108 = arith.constant 0 : index
    %183 = vector.load %arg6[%c1_105, %c2_106, %c0_107, %c0_108] : memref<2x3x16x16xf32, #tpu.memory_space<vmem>>, vector<1x1x16x16xf32>
    %184 = vector.shape_cast %183 : vector<1x1x16x16xf32> to vector<16x16xf32>
    %185 = vector.shape_cast %182 : vector<16x16xf32> to vector<1x1x16x16xf32>
    tpu.vector_store %arg6[%c1_105, %c2_106, %c0_107, %c0_108], %185 {strides = array<i32>} : memref<2x3x16x16xf32, #tpu.memory_space<vmem>>, vector<1x1x16x16xf32>,
    return
  }
}

</mosaic_0001>

<llo_original>
// kernel: tpu_custom_call.1
$region0: #{tpu_custom_call.1}
  #allocation0 [shape = 'u32[]', space=smem, size = 0x4, offset = 0x4, fixed_abs, tag = 'smem constant byte address 0x4 - core index']
  #allocation1 [shape = 'u32[144,128]{1,0:T(1,128)}', space=vmem, size = 0x12000, scoped, tag = 'internal scratch']
  %s0 = inlined_call_operand.vmem [shape: f32[2,9], index: 0, kind: input, shape index: {}]
  %s1 = inlined_call_operand.vmem [shape: f32[2,3], index: 1, kind: input, shape index: {}]
  %s2 = inlined_call_operand.vmem [shape: f32[2,3], index: 2, kind: input, shape index: {}]
  %s3 = inlined_call_operand.vmem [shape: bf16[2,16,32], index: 3, kind: input, shape index: {}]
  %s4 = inlined_call_operand.vmem [shape: bf16[40,32], index: 4, kind: input, shape index: {}]
  %s5 = inlined_call_operand.vmem [shape: u8[96,40], index: 5, kind: input, shape index: {}]
  %s6 = inlined_call_operand.hbm [shape: f32[2,3,16,16], index: 6, kind: output, shape index: {}]
  %s7 = sld [smem:[#allocation0]]
  $region46: #{tpu_custom_call.1} parent=0
    _
  %s9 = ssub.s32 1, %s7
  %s10 = scalar_select 0, %s9, %s7
  $region1: #{tpu_custom_call.1} parent=0
    #allocation2 [shape = 'u8[1024]{0}', space=smem, size = 0x400, scoped, tag = 'input window, operand 0, single buffered']
    #allocation3 [shape = 's32[1]{0}', space=sflag, size = 0x4, scoped, tag = 'scoped memory for tpu_custom_call.1']
    #allocation4 [shape = 's32[1]{0}', space=sflag, size = 0x4, scoped, tag = 'scoped memory for tpu_custom_call.1']
    #allocation5 [shape = 'u8[1024]{0}', space=smem, size = 0x400, scoped, tag = 'input window, operand 1, single buffered']
    #allocation6 [shape = 's32[1]{0}', space=sflag, size = 0x4, scoped, tag = 'scoped memory for tpu_custom_call.1']
    #allocation7 [shape = 'u8[1024]{0}', space=smem, size = 0x400, scoped, tag = 'input window, operand 2, single buffered']
    #allocation8 [shape = 'u8[49152]{0}', space=vmem, size = 0xc000, scoped, tag = 'output window, operand 0, single buffered']
    %11 = vsyncpa [#allocation4], 0
    %12 = vsyncpa [#allocation6], 0
    %13 = vsyncpa [#allocation3], 0
    // Predicated region
    $region2: #{tpu_custom_call.1} parent=1 // pred_check
      _
    $region3: #{tpu_custom_call.1} parent=1 // pred_check_branch
      %15 = sbr.rel (0) target = $region5
    $region4: #{tpu_custom_call.1} parent=1 // pred_region
      %s17 = ssub.s32 32, 32
      %18 = vsyncadd [#allocation4], %s17
      %s20 = sshll.u32 %s0, 4
      %s21 = int_to_ptr.vmem [resolvable:$true] %s20
      %23 = dma.vmem_to_smem %s21, 32, [#allocation2], [#allocation4]
    $region5: #{tpu_custom_call.1} parent=1 // pred_fallthru
      _
    // Predicated region
    $region6: #{tpu_custom_call.1} parent=1 // pred_check
      _
    $region7: #{tpu_custom_call.1} parent=1 // pred_check_branch
      %25 = sbr.rel (0) target = $region9
    $region8: #{tpu_custom_call.1} parent=1 // pred_region
      %s27 = ssub.s32 32, 32
      %28 = vsyncadd [#allocation6], %s27
      %s30 = sshll.u32 %s1, 4
      %s31 = int_to_ptr.vmem [resolvable:$true] %s30
      %33 = dma.vmem_to_smem %s31, 32, [#allocation5], [#allocation6]
    $region9: #{tpu_custom_call.1} parent=1 // pred_fallthru
      _
    // Predicated region
    $region10: #{tpu_custom_call.1} parent=1 // pred_check
      _
    $region11: #{tpu_custom_call.1} parent=1 // pred_check_branch
      %35 = sbr.rel (0) target = $region13
    $region12: #{tpu_custom_call.1} parent=1 // pred_region
      %s37 = ssub.s32 32, 32
      %38 = vsyncadd [#allocation6], %s37
      %s40 = sshll.u32 %s2, 4
      %s41 = int_to_ptr.vmem [resolvable:$true] %s40
      %43 = dma.vmem_to_smem %s41, 32, [#allocation7], [#allocation6]
    $region13: #{tpu_custom_call.1} parent=1 // pred_fallthru
      _
    // Predicated region
    $region14: #{tpu_custom_call.1} parent=1 // pred_check
      _
    $region15: #{tpu_custom_call.1} parent=1 // pred_check_branch
      %45 = sbr.rel (0) target = $region17
    $region16: #{tpu_custom_call.1} parent=1 // pred_region
      _
    $region17: #{tpu_custom_call.1} parent=1 // pred_fallthru
      _
    // Predicated region
    $region18: #{tpu_custom_call.1} parent=1 // pred_check
      _
    $region19: #{tpu_custom_call.1} parent=1 // pred_check_branch
      %47 = sbr.rel (0) target = $region21
    $region20: #{tpu_custom_call.1} parent=1 // pred_region
      _
    $region21: #{tpu_custom_call.1} parent=1 // pred_fallthru
      _
    // Predicated region
    $region22: #{tpu_custom_call.1} parent=1 // pred_check
      _
    $region23: #{tpu_custom_call.1} parent=1 // pred_check_branch
      %49 = sbr.rel (0) target = $region25
    $region24: #{tpu_custom_call.1} parent=1 // pred_region
      _
    $region25: #{tpu_custom_call.1} parent=1 // pred_fallthru
      _
    // Predicated region
    $region26: #{tpu_custom_call.1} parent=1 // pred_check
      _
    $region27: #{tpu_custom_call.1} parent=1 // pred_check_branch
      %51 = sbr.rel (0) target = $region29
    $region28: #{tpu_custom_call.1} parent=1 // pred_region
      %52 = dma.done [#allocation4], 32
    $region29: #{tpu_custom_call.1} parent=1 // pred_fallthru
      _
    // Predicated region
    $region30: #{tpu_custom_call.1} parent=1 // pred_check
      _
    $region31: #{tpu_custom_call.1} parent=1 // pred_check_branch
      %54 = sbr.rel (0) target = $region33
    $region32: #{tpu_custom_call.1} parent=1 // pred_region
      %55 = dma.done [#allocation6], 32
    $region33: #{tpu_custom_call.1} parent=1 // pred_fallthru
      _
    // Predicated region
    $region34: #{tpu_custom_call.1} parent=1 // pred_check
      _
    $region35: #{tpu_custom_call.1} parent=1 // pred_check_branch
      %57 = sbr.rel (0) target = $region37
    $region36: #{tpu_custom_call.1} parent=1 // pred_region
      %58 = dma.done [#allocation6], 32
    $region37: #{tpu_custom_call.1} parent=1 // pred_fallthru
      _
    %59 = sfence
    %v61 = vld [vmem:[%s5] sm:$0xff]
    %v62 = vld [vmem:[%s5 + $0x8] sm:$0xff]
    %v63 = vld [vmem:[%s5 + $0x10] sm:$0xff]
    %v64 = vunpack.c.l.u8.bf16 %v61
    %v65 = vunpack.c.h.u8.bf16 %v61
    %v66 = vunpack.c.l.u8.bf16 %v62
    %v67 = vunpack.c.h.u8.bf16 %v62
    %v68 = vunpack.c.l.u8.bf16 %v63
    %v69 = vunpack.c.h.u8.bf16 %v63
    %v70 = vld [vmem:[%s4] sm:$0xf]
    %v71 = vld [vmem:[%s4 + $0x4] sm:$0xf]
    %v72 = vld [vmem:[%s4 + $0x8] sm:$0xf]
    %v73 = vld [vmem:[%s4 + $0xc] sm:$0xf]
    %v74 = vld [vmem:[%s4 + $0x10] sm:$0xf]
    %v80 = vunpack.c.l.b16 %v70
    %v81 = vunpack.c.l.b16 %v71
    %v82 = vunpack.c.l.b16 %v72
    %v83 = vunpack.c.l.b16 %v73
    %v84 = vunpack.c.l.b16 %v74
    %v85 = vpack.c.b16 %v81, %v80
    %v86 = vpack.c.b16 %v83, %v82
    %v87 = vpack.c.b16 %v84, %v84
    %vm90 = vcmask 326656
    %v92 = vsel %vm90, %v64, 0
    %v95 = vsel %vm90, %v65, 0
    %v98 = vsel %vm90, %v66, 0
    %v101 = vsel %vm90, %v67, 0
    %v104 = vsel %vm90, %v68, 0
    %v107 = vsel %vm90, %v69, 0
    %vm109 = vcmask 1043456
    %v111 = vsel %vm109, %v87, 0
    %113 = vmatprep.subr.bf16.mxu0 0
    %114 = vmatpush1.bf16.msra.mxu0 %v85
    %115 = vmatprep.subr.bf16.mxu0 0
    %116 = vmatpush1.bf16.msra.mxu0 %v86
    %117 = vmatprep.subr.bf16.mxu0 0
    %118 = vmatpush1.bf16.msra.mxu0 %v111
    %119 = vmatprep.subr.bf16.mxu0 0
    %120 = vmatpush1.bf16.msra.mxu0 0
    %121 = vmatprep.subr.bf16.mxu0 0
    %122 = vmatpush1.bf16.msra.mxu0 0
    %123 = vmatprep.subr.bf16.mxu0 0
    %124 = vmatpush1.bf16.msra.mxu0 0
    %125 = vmatprep.subr.bf16.mxu0 0
    %126 = vmatpush1.bf16.msra.mxu0 0
    %127 = vmatprep.subr.bf16.mxu0 0
    %128 = vmatpush1.bf16.msra.mxu0 0
    %129 = vmatprep.subr.bf16.mxu0 0
    %130 = vmatpush1.bf16.msra.mxu0 0
    %131 = vmatprep.subr.bf16.mxu0 0
    %132 = vmatpush1.bf16.msra.mxu0 0
    %133 = vmatprep.subr.bf16.mxu0 0
    %134 = vmatpush1.bf16.msra.mxu0 0
    %135 = vmatprep.subr.bf16.mxu0 0
    %136 = vmatpush1.bf16.msra.mxu0 0
    %137 = vmatprep.subr.bf16.mxu0 0
    %138 = vmatpush1.bf16.msra.mxu0 0
    %139 = vmatprep.subr.bf16.mxu0 0
    %140 = vmatpush1.bf16.msra.mxu0 0
    %141 = vmatprep.subr.bf16.mxu0 0
    %142 = vmatpush1.bf16.msra.mxu0 0
    %143 = vmatprep.subr.bf16.mxu0 0
    %144 = vmatpush1.bf16.msra.mxu0 0
    %145 = vmatprep.mubr.bf16.mxu0 0
    %146 = vmatmul.mubr.bf16.gmra.mrb[0].mxu0 %v92
    %v147 = vpop.f32.mrb[0].mxu0
    %v148 = vadd.f32 0.0, %v147
    %v149 = vpop.f32.mrb[0].mxu0
    %v150 = vpop.f32.mrb[0].mxu0
    %v151 = vadd.f32 0.0, %v150
    %v152 = vpop.f32.mrb[0].mxu0
    %153 = vmatprep.mubr.bf16.mxu0 0
    %154 = vmatmul.mubr.bf16.gmra.mrb[0].mxu0 %v95
    %v155 = vpop.f32.mrb[0].mxu0
    %v156 = vadd.f32 0.0, %v155
    %v157 = vpop.f32.mrb[0].mxu0
    %v158 = vpop.f32.mrb[0].mxu0
    %v159 = vadd.f32 0.0, %v158
    %v160 = vpop.f32.mrb[0].mxu0
    %161 = vmatprep.mubr.bf16.mxu0 0
    %162 = vmatmul.mubr.bf16.gmra.mrb[0].mxu0 %v98
    %v163 = vpop.f32.mrb[0].mxu0
    %v164 = vadd.f32 0.0, %v163
    %v165 = vpop.f32.mrb[0].mxu0
    %v166 = vpop.f32.mrb[0].mxu0
    %v167 = vadd.f32 0.0, %v166
    %v168 = vpop.f32.mrb[0].mxu0
    %169 = vmatprep.mubr.bf16.mxu0 0
    %170 = vmatmul.mubr.bf16.gmra.mrb[0].mxu0 %v101
    %v171 = vpop.f32.mrb[0].mxu0
    %v172 = vadd.f32 0.0, %v171
    %v173 = vpop.f32.mrb[0].mxu0
    %v174 = vpop.f32.mrb[0].mxu0
    %v175 = vadd.f32 0.0, %v174
    %v176 = vpop.f32.mrb[0].mxu0
    %177 = vmatprep.mubr.bf16.mxu0 0
    %178 = vmatmul.mubr.bf16.gmra.mrb[0].mxu0 %v104
    %v179 = vpop.f32.mrb[0].mxu0
    %v180 = vadd.f32 0.0, %v179
    %v181 = vpop.f32.mrb[0].mxu0
    %v182 = vpop.f32.mrb[0].mxu0
    %v183 = vadd.f32 0.0, %v182
    %v184 = vpop.f32.mrb[0].mxu0
    %185 = vmatprep.mubr.bf16.mxu0 0
    %186 = vmatmul.mubr.bf16.gmra.mrb[0].mxu0 %v107
    %v187 = vpop.f32.mrb[0].mxu0
    %v188 = vadd.f32 0.0, %v187
    %v189 = vpop.f32.mrb[0].mxu0
    %v190 = vpop.f32.mrb[0].mxu0
    %v191 = vadd.f32 0.0, %v190
    %v192 = vpop.f32.mrb[0].mxu0
    %193 = vdwg.mxu0
    %v194 = vld [vmem:[%s3] sm:$0xf]
    %v195 = vld [vmem:[%s3 + $0x4] sm:$0xf]
    %v196 = vpack.c.bf16 %v151, %v148
    %v197 = vpack.c.bf16 %v159, %v156
    %v200 = vunpack.c.l.b16 %v194
    %v201 = vunpack.c.l.b16 %v195
    %v202 = vpack.c.b16 %v201, %v200
    %vm203 = vcmask 261120
    %v205 = vsel %vm203, %v202, 0
    %207 = vmatprep.subr.bf16.mxu0 0
    %208 = vmatpush1.bf16.msra.mxu0 %v196
    %209 = vmatprep.subr.bf16.mxu0 0
    %210 = vmatpush1.bf16.msra.mxu0 %v197
    %211 = vmatprep.subr.bf16.mxu0 0
    %212 = vmatpush1.bf16.msra.mxu0 0
    %213 = vmatprep.subr.bf16.mxu0 0
    %214 = vmatpush1.bf16.msra.mxu0 0
    %215 = vmatprep.subr.bf16.mxu0 0
    %216 = vmatpush1.bf16.msra.mxu0 0
    %217 = vmatprep.subr.bf16.mxu0 0
    %218 = vmatpush1.bf16.msra.mxu0 0
    %219 = vmatprep.subr.bf16.mxu0 0
    %220 = vmatpush1.bf16.msra.mxu0 0
    %221 = vmatprep.subr.bf16.mxu0 0
    %222 = vmatpush1.bf16.msra.mxu0 0
    %223 = vmatprep.subr.bf16.mxu0 0
    %224 = vmatpush1.bf16.msra.mxu0 0
    %225 = vmatprep.subr.bf16.mxu0 0
    %226 = vmatpush1.bf16.msra.mxu0 0
    %227 = vmatprep.subr.bf16.mxu0 0
    %228 = vmatpush1.bf16.msra.mxu0 0
    %229 = vmatprep.subr.bf16.mxu0 0
    %230 = vmatpush1.bf16.msra.mxu0 0
    %231 = vmatprep.subr.bf16.mxu0 0
    %232 = vmatpush1.bf16.msra.mxu0 0
    %233 = vmatprep.subr.bf16.mxu0 0
    %234 = vmatpush1.bf16.msra.mxu0 0
    %235 = vmatprep.subr.bf16.mxu0 0
    %236 = vmatpush1.bf16.msra.mxu0 0
    %237 = vmatprep.subr.bf16.mxu0 0
    %238 = vmatpush1.bf16.msra.mxu0 0
    %239 = vmatprep.mubr.bf16.mxu0 0
    %240 = vmatmul.mubr.bf16.gmra.mrb[0].mxu0 %v205
    %v241 = vpop.f32.mrb[0].mxu0
    %v242 = vadd.f32 0.0, %v241
    %v243 = vpop.f32.mrb[0].mxu0
    %v244 = vpop.f32.mrb[0].mxu0
    %v245 = vadd.f32 0.0, %v244
    %v246 = vpop.f32.mrb[0].mxu0
    %247 = vdwg.mxu0
    %v248 = vpack.c.bf16 %v167, %v164
    %v249 = vpack.c.bf16 %v175, %v172
    %250 = vmatprep.subr.bf16.mxu0 0
    %251 = vmatpush1.bf16.msra.mxu0 %v248
    %252 = vmatprep.subr.bf16.mxu0 0
    %253 = vmatpush1.bf16.msra.mxu0 %v249
    %254 = vmatprep.subr.bf16.mxu0 0
    %255 = vmatpush1.bf16.msra.mxu0 0
    %256 = vmatprep.subr.bf16.mxu0 0
    %257 = vmatpush1.bf16.msra.mxu0 0
    %258 = vmatprep.subr.bf16.mxu0 0
    %259 = vmatpush1.bf16.msra.mxu0 0
    %260 = vmatprep.subr.bf16.mxu0 0
    %261 = vmatpush1.bf16.msra.mxu0 0
    %262 = vmatprep.subr.bf16.mxu0 0
    %263 = vmatpush1.bf16.msra.mxu0 0
    %264 = vmatprep.subr.bf16.mxu0 0
    %265 = vmatpush1.bf16.msra.mxu0 0
    %266 = vmatprep.subr.bf16.mxu0 0
    %267 = vmatpush1.bf16.msra.mxu0 0
    %268 = vmatprep.subr.bf16.mxu0 0
    %269 = vmatpush1.bf16.msra.mxu0 0
    %270 = vmatprep.subr.bf16.mxu0 0
    %271 = vmatpush1.bf16.msra.mxu0 0
    %272 = vmatprep.subr.bf16.mxu0 0
    %273 = vmatpush1.bf16.msra.mxu0 0
    %274 = vmatprep.subr.bf16.mxu0 0
    %275 = vmatpush1.bf16.msra.mxu0 0
    %276 = vmatprep.subr.bf16.mxu0 0
    %277 = vmatpush1.bf16.msra.mxu0 0
    %278 = vmatprep.subr.bf16.mxu0 0
    %279 = vmatpush1.bf16.msra.mxu0 0
    %280 = vmatprep.subr.bf16.mxu0 0
    %281 = vmatpush1.bf16.msra.mxu0 0
    %282 = vmatprep.mubr.bf16.mxu0 0
    %283 = vmatmul.mubr.bf16.gmra.mrb[0].mxu0 %v205
    %v284 = vpop.f32.mrb[0].mxu0
    %v285 = vadd.f32 0.0, %v284
    %v286 = vpop.f32.mrb[0].mxu0
    %v287 = vpop.f32.mrb[0].mxu0
    %v288 = vadd.f32 0.0, %v287
    %v289 = vpop.f32.mrb[0].mxu0
    %290 = vdwg.mxu0
    %v291 = vpack.c.bf16 %v183, %v180
    %v292 = vpack.c.bf16 %v191, %v188
    %293 = vmatprep.subr.bf16.mxu0 0
    %294 = vmatpush1.bf16.msra.mxu0 %v291
    %295 = vmatprep.subr.bf16.mxu0 0
    %296 = vmatpush1.bf16.msra.mxu0 %v292
    %297 = vmatprep.subr.bf16.mxu0 0
    %298 = vmatpush1.bf16.msra.mxu0 0
    %299 = vmatprep.subr.bf16.mxu0 0
    %300 = vmatpush1.bf16.msra.mxu0 0
    %301 = vmatprep.subr.bf16.mxu0 0
    %302 = vmatpush1.bf16.msra.mxu0 0
    %303 = vmatprep.subr.bf16.mxu0 0
    %304 = vmatpush1.bf16.msra.mxu0 0
    %305 = vmatprep.subr.bf16.mxu0 0
    %306 = vmatpush1.bf16.msra.mxu0 0
    %307 = vmatprep.subr.bf16.mxu0 0
    %308 = vmatpush1.bf16.msra.mxu0 0
    %309 = vmatprep.subr.bf16.mxu0 0
    %310 = vmatpush1.bf16.msra.mxu0 0
    %311 = vmatprep.subr.bf16.mxu0 0
    %312 = vmatpush1.bf16.msra.mxu0 0
    %313 = vmatprep.subr.bf16.mxu0 0
    %314 = vmatpush1.bf16.msra.mxu0 0
    %315 = vmatprep.subr.bf16.mxu0 0
    %316 = vmatpush1.bf16.msra.mxu0 0
    %317 = vmatprep.subr.bf16.mxu0 0
    %318 = vmatpush1.bf16.msra.mxu0 0
    %319 = vmatprep.subr.bf16.mxu0 0
    %320 = vmatpush1.bf16.msra.mxu0 0
    %321 = vmatprep.subr.bf16.mxu0 0
    %322 = vmatpush1.bf16.msra.mxu0 0
    %323 = vmatprep.subr.bf16.mxu0 0
    %324 = vmatpush1.bf16.msra.mxu0 0
    %325 = vmatprep.mubr.bf16.mxu0 0
    %326 = vmatmul.mubr.bf16.gmra.mrb[0].mxu0 %v205
    %v327 = vpop.f32.mrb[0].mxu0
    %v328 = vadd.f32 0.0, %v327
    %v329 = vpop.f32.mrb[0].mxu0
    %v330 = vpop.f32.mrb[0].mxu0
    %v331 = vadd.f32 0.0, %v330
    %v332 = vpop.f32.mrb[0].mxu0
    %333 = vdwg.mxu0
    %vm334 = vcmask 130048
    %v335 = vsel %vm334, %v242, 0.0
    %v336 = vsel %vm334, %v245, 0.0
    %v337 = vadd.f32 %v335, %v336
    %338 = vadd.xlane.f32.xlu0 %v337
    %v339 = vpop.xlane.xlu0 %338
    %v340 = vrot.slane %v339, 4
    %v341 = vadd.f32 %v339, %v340
    %v342 = vrot.slane %v341, 2
    %v343 = vadd.f32 %v341, %v342
    %v344 = vrot.slane %v343, 1
    %v345 = vadd.f32 %v343, %v344
    %s346 = vtos %v345
    %v347 = vrcp.pop 256.0
    %s348 = vtos %v347
    %s349 = smul.f32 %s346, %s348
    %s350 = smul.f32 %s349, 0.299
    %v351 = vsel %vm334, %v285, 0.0
    %v352 = vsel %vm334, %v288, 0.0
    %v353 = vadd.f32 %v351, %v352
    %354 = vadd.xlane.f32.xlu0 %v353
    %v355 = vpop.xlane.xlu0 %354
    %v356 = vrot.slane %v355, 4
    %v357 = vadd.f32 %v355, %v356
    %v358 = vrot.slane %v357, 2
    %v359 = vadd.f32 %v357, %v358
    %v360 = vrot.slane %v359, 1
    %v361 = vadd.f32 %v359, %v360
    %s362 = vtos %v361
    %v363 = vrcp.pop 256.0
    %s364 = vtos %v363
    %s365 = smul.f32 %s362, %s364
    %s366 = smul.f32 %s365, 0.587
    %s367 = sadd.f32 %s350, %s366
    %v368 = vsel %vm334, %v328, 0.0
    %v369 = vsel %vm334, %v331, 0.0
    %v370 = vadd.f32 %v368, %v369
    %371 = vadd.xlane.f32.xlu0 %v370
    %v372 = vpop.xlane.xlu0 %371
    %v373 = vrot.slane %v372, 4
    %v374 = vadd.f32 %v372, %v373
    %v375 = vrot.slane %v374, 2
    %v376 = vadd.f32 %v374, %v375
    %v377 = vrot.slane %v376, 1
    %v378 = vadd.f32 %v376, %v377
    %s379 = vtos %v378
    %v380 = vrcp.pop 256.0
    %s381 = vtos %v380
    %s382 = smul.f32 %s379, %s381
    %s383 = smul.f32 %s382, 0.114
    %s384 = sadd.f32 %s367, %s383
    %s385 = sld [smem:[#allocation2]]
    %v386 = vstv %s385
    %v387 = vmul.f32 %v386, %v242
    %v388 = vmul.f32 %v386, %v245
    %s389 = sld [smem:[#allocation2 + $0x1]]
    %v390 = vstv %s389
    %v391 = vmul.f32 %v390, %v285
    %v392 = vmul.f32 %v390, %v288
    %v393 = vadd.f32 %v387, %v391
    %v394 = vadd.f32 %v388, %v392
    %s395 = sld [smem:[#allocation2 + $0x2]]
    %v396 = vstv %s395
    %v397 = vmul.f32 %v396, %v328
    %v398 = vmul.f32 %v396, %v331
    %v399 = vadd.f32 %v393, %v397
    %v400 = vadd.f32 %v394, %v398
    %s401 = sld [smem:[#allocation5]]
    %s402 = smul.f32 %s401, %s384
    %s403 = sld [smem:[#allocation7]]
    %s404 = sadd.f32 %s402, %s403
    %v405 = vstv %s404
    %v406 = vadd.f32 %v399, %v405
    %v407 = vadd.f32 %v400, %v405
    %408 = vst.msk [vmem:[#allocation8] sm:$0xff] %vm334, %v406
    %409 = vst.msk [vmem:[#allocation8 + $0x8] sm:$0xff] %vm334, %v407
    %s410 = sld [smem:[#allocation2 + $0x3]]
    %v411 = vstv %s410
    %v412 = vmul.f32 %v411, %v242
    %v413 = vmul.f32 %v411, %v245
    %s414 = sld [smem:[#allocation2 + $0x4]]
    %v415 = vstv %s414
    %v416 = vmul.f32 %v415, %v285
    %v417 = vmul.f32 %v415, %v288
    %v418 = vadd.f32 %v412, %v416
    %v419 = vadd.f32 %v413, %v417
    %s420 = sld [smem:[#allocation2 + $0x5]]
    %v421 = vstv %s420
    %v422 = vmul.f32 %v421, %v328
    %v423 = vmul.f32 %v421, %v331
    %v424 = vadd.f32 %v418, %v422
    %v425 = vadd.f32 %v419, %v423
    %s426 = sld [smem:[#allocation5 + $0x1]]
    %s427 = smul.f32 %s426, %s384
    %s428 = sld [smem:[#allocation7 + $0x1]]
    %s429 = sadd.f32 %s427, %s428
    %v430 = vstv %s429
    %v431 = vadd.f32 %v424, %v430
    %v432 = vadd.f32 %v425, %v430
    %s433 = scalar_lea.vmem [#allocation8], 16
    %434 = vst.msk [vmem:[%s433] sm:$0xff] %vm334, %v431
    %435 = vst.msk [vmem:[%s433 + $0x8] sm:$0xff] %vm334, %v432
    %s436 = sld [smem:[#allocation2 + $0x6]]
    %v437 = vstv %s436
    %v438 = vmul.f32 %v437, %v242
    %v439 = vmul.f32 %v437, %v245
    %s440 = sld [smem:[#allocation2 + $0x7]]
    %v441 = vstv %s440
    %v442 = vmul.f32 %v441, %v285
    %v443 = vmul.f32 %v441, %v288
    %v444 = vadd.f32 %v438, %v442
    %v445 = vadd.f32 %v439, %v443
    %s446 = sld [smem:[#allocation2 + $0x8]]
    %v447 = vstv %s446
    %v448 = vmul.f32 %v447, %v328
    %v449 = vmul.f32 %v447, %v331
    %v450 = vadd.f32 %v444, %v448
    %v451 = vadd.f32 %v445, %v449
    %s452 = sld [smem:[#allocation5 + $0x2]]
    %s453 = smul.f32 %s452, %s384
    %s454 = sld [smem:[#allocation7 + $0x2]]
    %s455 = sadd.f32 %s453, %s454
    %v456 = vstv %s455
    %v457 = vadd.f32 %v450, %v456
    %v458 = vadd.f32 %v451, %v456
    %s459 = scalar_lea.vmem [#allocation8], 32
    %460 = vst.msk [vmem:[%s459] sm:$0xff] %vm334, %v457
    %461 = vst.msk [vmem:[%s459 + $0x8] sm:$0xff] %vm334, %v458
    %s462 = scalar_lea.vmem %s3, 8
    %v463 = vld [vmem:[%s462] sm:$0xf]
    %v464 = vld [vmem:[%s462 + $0x4] sm:$0xf]
    %v467 = vunpack.c.l.b16 %v463
    %v468 = vunpack.c.l.b16 %v464
    %v469 = vpack.c.b16 %v468, %v467
    %472 = vrot.lane.b32.xlu0 %v196, 112
    %v473 = vpop.permute.xlu0 %472
    %474 = vrot.lane.b32.xlu0 %v197, 112
    %v475 = vpop.permute.xlu0 %474
    %v479 = vsel %vm203, %v469, 0
    %481 = vmatprep.subr.bf16.mxu0 0
    %482 = vmatpush1.bf16.msra.mxu0 %v473
    %483 = vmatprep.subr.bf16.mxu0 0
    %484 = vmatpush1.bf16.msra.mxu0 %v475
    %485 = vmatprep.subr.bf16.mxu0 0
    %486 = vmatpush1.bf16.msra.mxu0 0
    %487 = vmatprep.subr.bf16.mxu0 0
    %488 = vmatpush1.bf16.msra.mxu0 0
    %489 = vmatprep.subr.bf16.mxu0 0
    %490 = vmatpush1.bf16.msra.mxu0 0
    %491 = vmatprep.subr.bf16.mxu0 0
    %492 = vmatpush1.bf16.msra.mxu0 0
    %493 = vmatprep.subr.bf16.mxu0 0
    %494 = vmatpush1.bf16.msra.mxu0 0
    %495 = vmatprep.subr.bf16.mxu0 0
    %496 = vmatpush1.bf16.msra.mxu0 0
    %497 = vmatprep.subr.bf16.mxu0 0
    %498 = vmatpush1.bf16.msra.mxu0 0
    %499 = vmatprep.subr.bf16.mxu0 0
    %500 = vmatpush1.bf16.msra.mxu0 0
    %501 = vmatprep.subr.bf16.mxu0 0
    %502 = vmatpush1.bf16.msra.mxu0 0
    %503 = vmatprep.subr.bf16.mxu0 0
    %504 = vmatpush1.bf16.msra.mxu0 0
    %505 = vmatprep.subr.bf16.mxu0 0
    %506 = vmatpush1.bf16.msra.mxu0 0
    %507 = vmatprep.subr.bf16.mxu0 0
    %508 = vmatpush1.bf16.msra.mxu0 0
    %509 = vmatprep.subr.bf16.mxu0 0
    %510 = vmatpush1.bf16.msra.mxu0 0
    %511 = vmatprep.subr.bf16.mxu0 0
    %512 = vmatpush1.bf16.msra.mxu0 0
    %513 = vmatprep.mubr.bf16.mxu0 0
    %514 = vmatmul.mubr.bf16.gmra.mrb[0].mxu0 %v479
    %v515 = vpop.f32.mrb[0].mxu0
    %v516 = vadd.f32 0.0, %v515
    %v517 = vpop.f32.mrb[0].mxu0
    %v518 = vpop.f32.mrb[0].mxu0
    %v519 = vadd.f32 0.0, %v518
    %v520 = vpop.f32.mrb[0].mxu0
    %521 = vdwg.mxu0
    %524 = vrot.lane.b32.xlu0 %v248, 112
    %v525 = vpop.permute.xlu0 %524
    %526 = vrot.lane.b32.xlu0 %v249, 112
    %v527 = vpop.permute.xlu0 %526
    %530 = vmatprep.subr.bf16.mxu0 0
    %531 = vmatpush1.bf16.msra.mxu0 %v525
    %532 = vmatprep.subr.bf16.mxu0 0
    %533 = vmatpush1.bf16.msra.mxu0 %v527
    %534 = vmatprep.subr.bf16.mxu0 0
    %535 = vmatpush1.bf16.msra.mxu0 0
    %536 = vmatprep.subr.bf16.mxu0 0
    %537 = vmatpush1.bf16.msra.mxu0 0
    %538 = vmatprep.subr.bf16.mxu0 0
    %539 = vmatpush1.bf16.msra.mxu0 0
    %540 = vmatprep.subr.bf16.mxu0 0
    %541 = vmatpush1.bf16.msra.mxu0 0
    %542 = vmatprep.subr.bf16.mxu0 0
    %543 = vmatpush1.bf16.msra.mxu0 0
    %544 = vmatprep.subr.bf16.mxu0 0
    %545 = vmatpush1.bf16.msra.mxu0 0
    %546 = vmatprep.subr.bf16.mxu0 0
    %547 = vmatpush1.bf16.msra.mxu0 0
    %548 = vmatprep.subr.bf16.mxu0 0
    %549 = vmatpush1.bf16.msra.mxu0 0
    %550 = vmatprep.subr.bf16.mxu0 0
    %551 = vmatpush1.bf16.msra.mxu0 0
    %552 = vmatprep.subr.bf16.mxu0 0
    %553 = vmatpush1.bf16.msra.mxu0 0
    %554 = vmatprep.subr.bf16.mxu0 0
    %555 = vmatpush1.bf16.msra.mxu0 0
    %556 = vmatprep.subr.bf16.mxu0 0
    %557 = vmatpush1.bf16.msra.mxu0 0
    %558 = vmatprep.subr.bf16.mxu0 0
    %559 = vmatpush1.bf16.msra.mxu0 0
    %560 = vmatprep.subr.bf16.mxu0 0
    %561 = vmatpush1.bf16.msra.mxu0 0
    %562 = vmatprep.mubr.bf16.mxu0 0
    %563 = vmatmul.mubr.bf16.gmra.mrb[0].mxu0 %v479
    %v564 = vpop.f32.mrb[0].mxu0
    %v565 = vadd.f32 0.0, %v564
    %v566 = vpop.f32.mrb[0].mxu0
    %v567 = vpop.f32.mrb[0].mxu0
    %v568 = vadd.f32 0.0, %v567
    %v569 = vpop.f32.mrb[0].mxu0
    %570 = vdwg.mxu0
    %573 = vrot.lane.b32.xlu0 %v291, 112
    %v574 = vpop.permute.xlu0 %573
    %575 = vrot.lane.b32.xlu0 %v292, 112
    %v576 = vpop.permute.xlu0 %575
    %579 = vmatprep.subr.bf16.mxu0 0
    %580 = vmatpush1.bf16.msra.mxu0 %v574
    %581 = vmatprep.subr.bf16.mxu0 0
    %582 = vmatpush1.bf16.msra.mxu0 %v576
    %583 = vmatprep.subr.bf16.mxu0 0
    %584 = vmatpush1.bf16.msra.mxu0 0
    %585 = vmatprep.subr.bf16.mxu0 0
    %586 = vmatpush1.bf16.msra.mxu0 0
    %587 = vmatprep.subr.bf16.mxu0 0
    %588 = vmatpush1.bf16.msra.mxu0 0
    %589 = vmatprep.subr.bf16.mxu0 0
    %590 = vmatpush1.bf16.msra.mxu0 0
    %591 = vmatprep.subr.bf16.mxu0 0
    %592 = vmatpush1.bf16.msra.mxu0 0
    %593 = vmatprep.subr.bf16.mxu0 0
    %594 = vmatpush1.bf16.msra.mxu0 0
    %595 = vmatprep.subr.bf16.mxu0 0
    %596 = vmatpush1.bf16.msra.mxu0 0
    %597 = vmatprep.subr.bf16.mxu0 0
    %598 = vmatpush1.bf16.msra.mxu0 0
    %599 = vmatprep.subr.bf16.mxu0 0
    %600 = vmatpush1.bf16.msra.mxu0 0
    %601 = vmatprep.subr.bf16.mxu0 0
    %602 = vmatpush1.bf16.msra.mxu0 0
    %603 = vmatprep.subr.bf16.mxu0 0
    %604 = vmatpush1.bf16.msra.mxu0 0
    %605 = vmatprep.subr.bf16.mxu0 0
    %606 = vmatpush1.bf16.msra.mxu0 0
    %607 = vmatprep.subr.bf16.mxu0 0
    %608 = vmatpush1.bf16.msra.mxu0 0
    %609 = vmatprep.subr.bf16.mxu0 0
    %610 = vmatpush1.bf16.msra.mxu0 0
    %611 = vmatprep.mubr.bf16.mxu0 0
    %612 = vmatmul.mubr.bf16.gmra.mrb[0].mxu0 %v479
    %v613 = vpop.f32.mrb[0].mxu0
    %v614 = vadd.f32 0.0, %v613
    %v615 = vpop.f32.mrb[0].mxu0
    %v616 = vpop.f32.mrb[0].mxu0
    %v617 = vadd.f32 0.0, %v616
    %v618 = vpop.f32.mrb[0].mxu0
    %619 = vdwg.mxu0
    %v620 = vsel %vm334, %v516, 0.0
    %v621 = vsel %vm334, %v519, 0.0
    %v622 = vadd.f32 %v620, %v621
    %623 = vadd.xlane.f32.xlu0 %v622
    %v624 = vpop.xlane.xlu0 %623
    %v625 = vrot.slane %v624, 4
    %v626 = vadd.f32 %v624, %v625
    %v627 = vrot.slane %v626, 2
    %v628 = vadd.f32 %v626, %v627
    %v629 = vrot.slane %v628, 1
    %v630 = vadd.f32 %v628, %v629
    %s631 = vtos %v630
    %v632 = vrcp.pop 256.0
    %s633 = vtos %v632
    %s634 = smul.f32 %s631, %s633
    %s635 = smul.f32 %s634, 0.299
    %v636 = vsel %vm334, %v565, 0.0
    %v637 = vsel %vm334, %v568, 0.0
    %v638 = vadd.f32 %v636, %v637
    %639 = vadd.xlane.f32.xlu0 %v638
    %v640 = vpop.xlane.xlu0 %639
    %v641 = vrot.slane %v640, 4
    %v642 = vadd.f32 %v640, %v641
    %v643 = vrot.slane %v642, 2
    %v644 = vadd.f32 %v642, %v643
    %v645 = vrot.slane %v644, 1
    %v646 = vadd.f32 %v644, %v645
    %s647 = vtos %v646
    %v648 = vrcp.pop 256.0
    %s649 = vtos %v648
    %s650 = smul.f32 %s647, %s649
    %s651 = smul.f32 %s650, 0.587
    %s652 = sadd.f32 %s635, %s651
    %v653 = vsel %vm334, %v614, 0.0
    %v654 = vsel %vm334, %v617, 0.0
    %v655 = vadd.f32 %v653, %v654
    %656 = vadd.xlane.f32.xlu0 %v655
    %v657 = vpop.xlane.xlu0 %656
    %v658 = vrot.slane %v657, 4
    %v659 = vadd.f32 %v657, %v658
    %v660 = vrot.slane %v659, 2
    %v661 = vadd.f32 %v659, %v660
    %v662 = vrot.slane %v661, 1
    %v663 = vadd.f32 %v661, %v662
    %s664 = vtos %v663
    %v665 = vrcp.pop 256.0
    %s666 = vtos %v665
    %s667 = smul.f32 %s664, %s666
    %s668 = smul.f32 %s667, 0.114
    %s669 = sadd.f32 %s652, %s668
    %s670 = sld [smem:[#allocation2 + $0x80]]
    %v671 = vstv %s670
    %v672 = vmul.f32 %v671, %v516
    %v673 = vmul.f32 %v671, %v519
    %s674 = sld [smem:[#allocation2 + $0x81]]
    %v675 = vstv %s674
    %v676 = vmul.f32 %v675, %v565
    %v677 = vmul.f32 %v675, %v568
    %v678 = vadd.f32 %v672, %v676
    %v679 = vadd.f32 %v673, %v677
    %s680 = sld [smem:[#allocation2 + $0x82]]
    %v681 = vstv %s680
    %v682 = vmul.f32 %v681, %v614
    %v683 = vmul.f32 %v681, %v617
    %v684 = vadd.f32 %v678, %v682
    %v685 = vadd.f32 %v679, %v683
    %s686 = sld [smem:[#allocation5 + $0x80]]
    %s687 = smul.f32 %s686, %s669
    %s688 = sld [smem:[#allocation7 + $0x80]]
    %s689 = sadd.f32 %s687, %s688
    %v690 = vstv %s689
    %v691 = vadd.f32 %v684, %v690
    %v692 = vadd.f32 %v685, %v690
    %s693 = scalar_lea.vmem [#allocation8], 48
    %694 = vst.msk [vmem:[%s693] sm:$0xff] %vm334, %v691
    %695 = vst.msk [vmem:[%s693 + $0x8] sm:$0xff] %vm334, %v692
    %s696 = sld [smem:[#allocation2 + $0x83]]
    %v697 = vstv %s696
    %v698 = vmul.f32 %v697, %v516
    %v699 = vmul.f32 %v697, %v519
    %s700 = sld [smem:[#allocation2 + $0x84]]
    %v701 = vstv %s700
    %v702 = vmul.f32 %v701, %v565
    %v703 = vmul.f32 %v701, %v568
    %v704 = vadd.f32 %v698, %v702
    %v705 = vadd.f32 %v699, %v703
    %s706 = sld [smem:[#allocation2 + $0x85]]
    %v707 = vstv %s706
    %v708 = vmul.f32 %v707, %v614
    %v709 = vmul.f32 %v707, %v617
    %v710 = vadd.f32 %v704, %v708
    %v711 = vadd.f32 %v705, %v709
    %s712 = sld [smem:[#allocation5 + $0x81]]
    %s713 = smul.f32 %s712, %s669
    %s714 = sld [smem:[#allocation7 + $0x81]]
    %s715 = sadd.f32 %s713, %s714
    %v716 = vstv %s715
    %v717 = vadd.f32 %v710, %v716
    %v718 = vadd.f32 %v711, %v716
    %s719 = scalar_lea.vmem [#allocation8], 64
    %720 = vst.msk [vmem:[%s719] sm:$0xff] %vm334, %v717
    %721 = vst.msk [vmem:[%s719 + $0x8] sm:$0xff] %vm334, %v718
    %s722 = sld [smem:[#allocation2 + $0x86]]
    %v723 = vstv %s722
    %v724 = vmul.f32 %v723, %v516
    %v725 = vmul.f32 %v723, %v519
    %s726 = sld [smem:[#allocation2 + $0x87]]
    %v727 = vstv %s726
    %v728 = vmul.f32 %v727, %v565
    %v729 = vmul.f32 %v727, %v568
    %v730 = vadd.f32 %v724, %v728
    %v731 = vadd.f32 %v725, %v729
    %s732 = sld [smem:[#allocation2 + $0x88]]
    %v733 = vstv %s732
    %v734 = vmul.f32 %v733, %v614
    %v735 = vmul.f32 %v733, %v617
    %v736 = vadd.f32 %v730, %v734
    %v737 = vadd.f32 %v731, %v735
    %s738 = sld [smem:[#allocation5 + $0x82]]
    %s739 = smul.f32 %s738, %s669
    %s740 = sld [smem:[#allocation7 + $0x82]]
    %s741 = sadd.f32 %s739, %s740
    %v742 = vstv %s741
    %v743 = vadd.f32 %v736, %v742
    %v744 = vadd.f32 %v737, %v742
    %s745 = scalar_lea.vmem [#allocation8], 80
    %746 = vst.msk [vmem:[%s745] sm:$0xff] %vm334, %v743
    %747 = vst.msk [vmem:[%s745 + $0x8] sm:$0xff] %vm334, %v744
    // Predicated region
    $region38: #{tpu_custom_call.1} parent=1 // pred_check
      _
    $region39: #{tpu_custom_call.1} parent=1 // pred_check_branch
      %749 = sbr.rel (0) target = $region41
    $region40: #{tpu_custom_call.1} parent=1 // pred_region
      %s751 = ssub.s32 1536, 1536
      %752 = vsyncadd [#allocation3], %s751
      %s753 = sshll.u32 [#allocation8], 4
      %s754 = int_to_ptr.vmem [resolvable:$true] %s753
      %759 = dma.vmem_to_hbm [thread:$0]  %s754, 1536, %s6, [#allocation3], 128, 128, 8
    $region41: #{tpu_custom_call.1} parent=1 // pred_fallthru
      _
    // Predicated region
    $region42: #{tpu_custom_call.1} parent=1 // pred_check
      _
    $region43: #{tpu_custom_call.1} parent=1 // pred_check_branch
      %761 = sbr.rel (0) target = $region45
    $region44: #{tpu_custom_call.1} parent=1 // pred_region
      %762 = dma.done [#allocation3], 1536
    $region45: #{tpu_custom_call.1} parent=1 // pred_fallthru
      _
    %763 = vsyncpa [#allocation3], 1
    %764 = vsyncpa [#allocation4], 1
    %765 = vsyncpa [#allocation6], 1

</llo_original>
